<compile_context>
chip_gen: v5e
topology: v5e:2x2
jax: 0.10.0
libtpu: 0.0.40
codegen_flags: <defaults>
</compile_context>

<pallas_src>
import math

import jax
import jax.numpy as jnp
import numpy as np
from jax.experimental import pallas as pl
from jax.experimental.pallas import tpu as pltpu

# MXU-native on all three generations; set to jnp.float32 for exact f32 parity
# with the PyTorch module (then the 1e-5 tolerance applies).
WEIGHT_DTYPE = jnp.bfloat16


def _leaky_relu(x, slope=0.1):
    return jnp.where(x > 0, x, slope * x)


def qnet_kernel(x_ref, w1_ref, b1_ref, w2_ref, b2_ref, w3_ref, b3_ref, o_ref):
    """Fused 3-layer MLP on one batch tile: matmul+bias+LeakyReLU x2, final linear.

    Weights are (in, out) and may be bf16; all dots accumulate in f32 on the MXU.
    """
    wdt = w1_ref.dtype
    x = x_ref[...].astype(wdt)
    h = jnp.dot(x, w1_ref[...], preferred_element_type=jnp.float32) + b1_ref[...]
    h = _leaky_relu(h).astype(wdt)
    h = jnp.dot(h, w2_ref[...], preferred_element_type=jnp.float32) + b2_ref[...]
    h = _leaky_relu(h).astype(wdt)
    out = jnp.dot(h, w3_ref[...], preferred_element_type=jnp.float32) + b3_ref[...]
    o_ref[...] = out.astype(o_ref.dtype)


def _round_up(x, m):
    return ((x + m - 1) // m) * m


def _vmem_capacity_bytes():
    try:
        return int(pltpu.get_tpu_info().vmem_capacity_bytes)
    except Exception:
        return 64 * 1024 * 1024  # conservative default (v7x per-core VMEM)


def _choose_tile_b(B, max_rows):
    """Batch tile: multiple of 8, divides B, as large as the VMEM row budget
    allows (per-grid-step overhead ~0.35us favors big tiles), but capped so
    large batches still yield >=4 grid steps (2 per TensorCore on megacore
    parts).  Falls back to one full-array block for small / awkward batches
    rather than many tiny steps."""
    if B <= 8:
        return B
    cap = min(B, max_rows, 2048)
    if B >= 512:
        cap = min(cap, B // 4)   # >= 4 grid steps -> both TCs busy + pipelining
    cap -= cap % 8
    for t in range(cap, 31, -8):
        if B % t == 0:
            return t
    if B <= max_rows:
        return B                 # single full-array block
    for t in range(min(cap, 24), 7, -8):  # last resort for huge n + awkward B
        if B % t == 0:
            return t
    return B


def _qnet_pallas(x, params, *, single_buffer_weights):
    B, n = x.shape
    w1, b1 = params["w1"], params["b1"]   # (n,   n2p) , (1, n2p)
    w2, b2 = params["w2"], params["b2"]   # (n2p, n2p) , (1, n2p)
    w3, b3 = params["w3"], params["b3"]   # (n2p, np_) , (1, np_)
    n2p, np_ = w1.shape[1], w3.shape[1]
    assert w1.shape[0] == n and w2.shape == (n2p, n2p) and w3.shape[0] == n2p

    wbytes = w1.dtype.itemsize
    weight_bytes = wbytes * (n * n2p + n2p * n2p + n2p * np_) + 4 * (2 * n2p + np_)
    weight_bufs = 1 if single_buffer_weights else 2

    # Scoped VMEM: physical capacity minus headroom for compiler scratch
    # (~48 MiB on v7x, ~112 MiB on v5e/v6e).
    usable_vmem = max(32 << 20, _vmem_capacity_bytes() - (16 << 20))

    # Per-batch-row VMEM: x/out tiles double-buffered f32 + f32 intermediates
    # + their low-precision casts.
    per_row = 8 * (n + np_) + 2 * (4 + wbytes) * n2p + wbytes * n
    max_rows = max(8, (usable_vmem - weight_bufs * weight_bytes - (4 << 20)) // per_row)
    tile_b = _choose_tile_b(B, max_rows)
    if B % tile_b:
        tile_b = B
    grid = (B // tile_b,)

    weight_mode = pl.Buffered(1) if single_buffer_weights else None

    def resident(shape):
        # Constant block index: operand stays VMEM-resident across the grid.
        return pl.BlockSpec(shape, lambda i: (0, 0), pipeline_mode=weight_mode)

    in_specs = [
        pl.BlockSpec((tile_b, n), lambda i: (i, 0)),   # x tile streams over batch
        resident((n, n2p)), resident((1, n2p)),        # w1, b1
        resident((n2p, n2p)), resident((1, n2p)),      # w2, b2
        resident((n2p, np_)), resident((1, np_)),      # w3, b3
    ]
    out_specs = pl.BlockSpec((tile_b, np_), lambda i: (i, 0))

    vmem_limit = int(max(8 << 20,
                         min(usable_vmem,
                             weight_bufs * weight_bytes + tile_b * per_row + (4 << 20))))

    flops = 2 * B * (n * n2p + n2p * n2p + n2p * np_)
    bytes_accessed = 4 * B * (n + np_) + weight_bytes

    out = pl.pallas_call(
        qnet_kernel,
        out_shape=jax.ShapeDtypeStruct((B, np_), jnp.float32),
        grid=grid,
        in_specs=in_specs,
        out_specs=out_specs,
        compiler_params=pltpu.CompilerParams(
            dimension_semantics=("parallel",),
            vmem_limit_bytes=vmem_limit,
        ),
        cost_estimate=pl.CostEstimate(
            flops=int(flops), transcendentals=0, bytes_accessed=int(bytes_accessed)),
    )(x, w1, b1, w2, b2, w3, b3)
    return out if np_ == n else out[:, :n]


def qnet_forward(x, params):
    """x: (B, ncells) float32 -> (B, ncells) float32 Q-values."""
    try:
        return _qnet_pallas(x, params, single_buffer_weights=True)
    except Exception:
        # pipeline_mode=pl.Buffered(1) unsupported by this jax/libtpu build:
        # fall back to default double-buffered resident weights (correct, just
        # uses 2x weight VMEM).
        return _qnet_pallas(x, params, single_buffer_weights=False)


def _orthogonal(key, shape, gain):
    """Deterministic orthogonal init matching nn.init.orthogonal_ semantics."""
    rows, cols = shape
    flat_shape = (rows, cols) if rows >= cols else (cols, rows)
    a = jax.random.normal(key, flat_shape, dtype=jnp.float32)
    q, r = jnp.linalg.qr(a)
    q = q * jnp.sign(jnp.diag(r))  # make decomposition unique
    if rows < cols:
        q = q.T
    return gain * q[:rows, :cols]


def make_params(key, ncells, weight_dtype=WEIGHT_DTYPE):
    """Orthogonal-init (gain sqrt(2)) weights, stored pre-transposed (in, out),
    zero-padded along each *output* feature dim to a multiple of 128 lanes, and
    cast once to `weight_dtype`.  Biases stay f32 (added in f32 in-kernel)."""
    gain = math.sqrt(2.0)
    n, n2 = ncells, 2 * ncells
    np_, n2p = _round_up(n, 128), _round_up(n2, 128)
    k1, k2, k3 = jax.random.split(key, 3)

    w1 = _orthogonal(k1, (n2, n), gain).T    # torch (out,in) -> (in,out) = (n, 2n)
    w2 = _orthogonal(k2, (n2, n2), gain).T   # (2n, 2n)
    w3 = _orthogonal(k3, (n, n2), gain).T    # (2n, n)

    def pad(w, rows, cols):
        buf = jnp.zeros((rows, cols), weight_dtype)
        return buf.at[: w.shape[0], : w.shape[1]].set(w.astype(weight_dtype))

    return {
        "w1": pad(w1, n, n2p),   "b1": jnp.zeros((1, n2p), jnp.float32),
        "w2": pad(w2, n2p, n2p), "b2": jnp.zeros((1, n2p), jnp.float32),
        "w3": pad(w3, n2p, np_), "b3": jnp.zeros((1, np_), jnp.float32),
    }


def qnet_reference(x, params):
    """Pure-JAX reference mirroring the kernel's cast points (bf16 operands,
    f32 accumulation) so the comparison isolates kernel bugs, not dtype noise."""
    n = x.shape[1]
    wdt = params["w1"].dtype

    def lin(h, w, b):
        return h.astype(wdt).astype(jnp.float32) @ w.astype(jnp.float32) + b

    h = _leaky_relu(lin(x, params["w1"], params["b1"]))
    h = _leaky_relu(lin(h, params["w2"], params["b2"]))
    out = lin(h, params["w3"], params["b3"])
    return out[:, :n]


if __name__ == "__main__":
    ncells = 32

    key = jax.random.PRNGKey(0)
    kp, kx1, kx2 = jax.random.split(key, 3)
    params = make_params(kp, ncells)

    if params["w1"].dtype == jnp.float32:
        tol = dict(rtol=1e-5, atol=1e-5)
    else:  # bf16 weights: f32-accumulated, so only ordering/rounding noise remains
        tol = dict(rtol=1e-2, atol=1e-2)

    # Small demo batch (single full-array block path).
    x_small = jax.random.normal(kx1, (2, ncells), dtype=jnp.float32)
    out_small = jax.block_until_ready(qnet_forward(x_small, params))
    np.testing.assert_allclose(np.asarray(out_small),
                               np.asarray(qnet_reference(x_small, params)), **tol)

    # Replay-buffer-sized batch (exercises the batch grid / resident weights).
    x_large = jax.random.normal(kx2, (1024, ncells), dtype=jnp.float32)
    out_large = jax.block_until_ready(qnet_forward(x_large, params))
    np.testing.assert_allclose(np.asarray(out_large),
                               np.asarray(qnet_reference(x_large, params)), **tol)

    print("KERNEL_OK")
</pallas_src>

<mosaic_0001>
module attributes {stable_mosaic.version = 11 : i64} {
  func.func @qnet_kernel(%arg0: i32, %arg1: memref<2x32xf32, #tpu.memory_space<vmem>>, %arg2: memref<32x128xbf16, #tpu.memory_space<vmem>>, %arg3: memref<1x128xf32, #tpu.memory_space<vmem>>, %arg4: memref<128x128xbf16, #tpu.memory_space<vmem>>, %arg5: memref<1x128xf32, #tpu.memory_space<vmem>>, %arg6: memref<128x128xbf16, #tpu.memory_space<vmem>>, %arg7: memref<1x128xf32, #tpu.memory_space<vmem>>, %arg8: memref<2x128xf32, #tpu.memory_space<vmem>>) attributes {dimension_semantics = [#tpu.dimension_semantics<parallel>], iteration_bounds = array<i64: 1>, scalar_prefetch = 0 : i64, scratch_operands = 0 : i64, tpu.core_type = #tpu.core_type<tc>, window_params = [{transform_indices = @transform_0, window_bounds = array<i64: 2, 32>}, {pipeline_mode = #tpu.pipeline_mode<synchronous>, transform_indices = @transform_1, window_bounds = array<i64: 32, 128>}, {pipeline_mode = #tpu.pipeline_mode<synchronous>, transform_indices = @transform_2, window_bounds = array<i64: 1, 128>}, {pipeline_mode = #tpu.pipeline_mode<synchronous>, transform_indices = @transform_3, window_bounds = array<i64: 128, 128>}, {pipeline_mode = #tpu.pipeline_mode<synchronous>, transform_indices = @transform_4, window_bounds = array<i64: 1, 128>}, {pipeline_mode = #tpu.pipeline_mode<synchronous>, transform_indices = @transform_5, window_bounds = array<i64: 128, 128>}, {pipeline_mode = #tpu.pipeline_mode<synchronous>, transform_indices = @transform_6, window_bounds = array<i64: 1, 128>}, {transform_indices = @transform_7, window_bounds = array<i64: 2, 128>}]} {
    %c0 = arith.constant 0 : index
    %c0_0 = arith.constant 0 : index
    %0 = vector.load %arg1[%c0, %c0_0] : memref<2x32xf32, #tpu.memory_space<vmem>>, vector<2x32xf32>
    %1 = arith.truncf %0 : vector<2x32xf32> to vector<2x32xbf16>
    %c0_1 = arith.constant 0 : index
    %c0_2 = arith.constant 0 : index
    %2 = vector.load %arg2[%c0_1, %c0_2] : memref<32x128xbf16, #tpu.memory_space<vmem>>, vector<32x128xbf16>
    %cst = arith.constant dense<0.000000e+00> : vector<2x128xf32>
    %3 = tpu.matmul %1, %2, %cst {dimension_numbers = #tpu.dot_dimension_numbers<[1], [0], [0], [1], [0, 0, 1, 1], [], []>} : vector<2x32xbf16>, vector<32x128xbf16>, vector<2x128xf32> -> vector<2x128xf32>
    %c0_3 = arith.constant 0 : index
    %c0_4 = arith.constant 0 : index
    %4 = vector.load %arg3[%c0_3, %c0_4] : memref<1x128xf32, #tpu.memory_space<vmem>>, vector<1x128xf32>
    %5 = vector.broadcast %4 : vector<1x128xf32> to vector<2x128xf32>
    %6 = arith.addf %3, %5 : vector<2x128xf32>
    %cst_5 = arith.constant 0.000000e+00 : f32
    %7 = vector.broadcast %cst_5 : f32 to vector<2x128xf32>
    %8 = arith.cmpf ogt, %6, %7 : vector<2x128xf32>
    %cst_6 = arith.constant 1.000000e-01 : f32
    %9 = vector.broadcast %cst_6 : f32 to vector<2x128xf32>
    %10 = arith.mulf %9, %6 : vector<2x128xf32>
    %11 = arith.select %8, %6, %10 : vector<2x128xi1>, vector<2x128xf32>
    %12 = arith.truncf %11 : vector<2x128xf32> to vector<2x128xbf16>
    %c0_7 = arith.constant 0 : index
    %c0_8 = arith.constant 0 : index
    %13 = vector.load %arg4[%c0_7, %c0_8] : memref<128x128xbf16, #tpu.memory_space<vmem>>, vector<128x128xbf16>
    %cst_9 = arith.constant dense<0.000000e+00> : vector<2x128xf32>
    %14 = tpu.matmul %12, %13, %cst_9 {dimension_numbers = #tpu.dot_dimension_numbers<[1], [0], [0], [1], [0, 0, 1, 1], [], []>} : vector<2x128xbf16>, vector<128x128xbf16>, vector<2x128xf32> -> vector<2x128xf32>
    %c0_10 = arith.constant 0 : index
    %c0_11 = arith.constant 0 : index
    %15 = vector.load %arg5[%c0_10, %c0_11] : memref<1x128xf32, #tpu.memory_space<vmem>>, vector<1x128xf32>
    %16 = vector.broadcast %15 : vector<1x128xf32> to vector<2x128xf32>
    %17 = arith.addf %14, %16 : vector<2x128xf32>
    %cst_12 = arith.constant 0.000000e+00 : f32
    %18 = vector.broadcast %cst_12 : f32 to vector<2x128xf32>
    %19 = arith.cmpf ogt, %17, %18 : vector<2x128xf32>
    %cst_13 = arith.constant 1.000000e-01 : f32
    %20 = vector.broadcast %cst_13 : f32 to vector<2x128xf32>
    %21 = arith.mulf %20, %17 : vector<2x128xf32>
    %22 = arith.select %19, %17, %21 : vector<2x128xi1>, vector<2x128xf32>
    %23 = arith.truncf %22 : vector<2x128xf32> to vector<2x128xbf16>
    %c0_14 = arith.constant 0 : index
    %c0_15 = arith.constant 0 : index
    %24 = vector.load %arg6[%c0_14, %c0_15] : memref<128x128xbf16, #tpu.memory_space<vmem>>, vector<128x128xbf16>
    %cst_16 = arith.constant dense<0.000000e+00> : vector<2x128xf32>
    %25 = tpu.matmul %23, %24, %cst_16 {dimension_numbers = #tpu.dot_dimension_numbers<[1], [0], [0], [1], [0, 0, 1, 1], [], []>} : vector<2x128xbf16>, vector<128x128xbf16>, vector<2x128xf32> -> vector<2x128xf32>
    %c0_17 = arith.constant 0 : index
    %c0_18 = arith.constant 0 : index
    %26 = vector.load %arg7[%c0_17, %c0_18] : memref<1x128xf32, #tpu.memory_space<vmem>>, vector<1x128xf32>
    %27 = vector.broadcast %26 : vector<1x128xf32> to vector<2x128xf32>
    %28 = arith.addf %25, %27 : vector<2x128xf32>
    %c0_19 = arith.constant 0 : index
    %c0_20 = arith.constant 0 : index
    %29 = vector.load %arg8[%c0_19, %c0_20] : memref<2x128xf32, #tpu.memory_space<vmem>>, vector<2x128xf32>
    tpu.vector_store %arg8[%c0_19, %c0_20], %28 {strides = array<i32>} : memref<2x128xf32, #tpu.memory_space<vmem>>, vector<2x128xf32>,
    return
  }
  func.func @transform_0(%arg0: i32) -> (i32, i32) {
    %c0_i32 = arith.constant 0 : i32
    %c0_i32_0 = arith.constant 0 : i32
    return %arg0, %c0_i32 : i32, i32
  }
  func.func @transform_1(%arg0: i32) -> (i32, i32) {
    %c0_i32 = arith.constant 0 : i32
    %c0_i32_0 = arith.constant 0 : i32
    %c0_i32_1 = arith.constant 0 : i32
    return %c0_i32, %c0_i32_0 : i32, i32
  }
  func.func @transform_2(%arg0: i32) -> (i32, i32) {
    %c0_i32 = arith.constant 0 : i32
    %c0_i32_0 = arith.constant 0 : i32
    %c0_i32_1 = arith.constant 0 : i32
    return %c0_i32, %c0_i32_0 : i32, i32
  }
  func.func @transform_3(%arg0: i32) -> (i32, i32) {
    %c0_i32 = arith.constant 0 : i32
    %c0_i32_0 = arith.constant 0 : i32
    %c0_i32_1 = arith.constant 0 : i32
    return %c0_i32, %c0_i32_0 : i32, i32
  }
  func.func @transform_4(%arg0: i32) -> (i32, i32) {
    %c0_i32 = arith.constant 0 : i32
    %c0_i32_0 = arith.constant 0 : i32
    %c0_i32_1 = arith.constant 0 : i32
    return %c0_i32, %c0_i32_0 : i32, i32
  }
  func.func @transform_5(%arg0: i32) -> (i32, i32) {
    %c0_i32 = arith.constant 0 : i32
    %c0_i32_0 = arith.constant 0 : i32
    %c0_i32_1 = arith.constant 0 : i32
    return %c0_i32, %c0_i32_0 : i32, i32
  }
  func.func @transform_6(%arg0: i32) -> (i32, i32) {
    %c0_i32 = arith.constant 0 : i32
    %c0_i32_0 = arith.constant 0 : i32
    %c0_i32_1 = arith.constant 0 : i32
    return %c0_i32, %c0_i32_0 : i32, i32
  }
  func.func @transform_7(%arg0: i32) -> (i32, i32) {
    %c0_i32 = arith.constant 0 : i32
    %c0_i32_0 = arith.constant 0 : i32
    return %arg0, %c0_i32 : i32, i32
  }
}

module attributes {stable_mosaic.version = 11 : i64} {
  func.func @qnet_kernel(%arg0: i32, %arg1: memref<2x32xf32, #tpu.memory_space<vmem>>, %arg2: memref<32x128xbf16, #tpu.memory_space<vmem>>, %arg3: memref<1x128xf32, #tpu.memory_space<vmem>>, %arg4: memref<128x128xbf16, #tpu.memory_space<vmem>>, %arg5: memref<1x128xf32, #tpu.memory_space<vmem>>, %arg6: memref<128x128xbf16, #tpu.memory_space<vmem>>, %arg7: memref<1x128xf32, #tpu.memory_space<vmem>>, %arg8: memref<2x128xf32, #tpu.memory_space<vmem>>) attributes {dimension_semantics = [#tpu.dimension_semantics<parallel>], iteration_bounds = array<i64: 1>, scalar_prefetch = 0 : i64, scratch_operands = 0 : i64, tpu.core_type = #tpu.core_type<tc>, window_params = [{transform_indices = @transform_0, window_bounds = array<i64: 2, 32>}, {pipeline_mode = #tpu.pipeline_mode<synchronous>, transform_indices = @transform_1, window_bounds = array<i64: 32, 128>}, {pipeline_mode = #tpu.pipeline_mode<synchronous>, transform_indices = @transform_2, window_bounds = array<i64: 1, 128>}, {pipeline_mode = #tpu.pipeline_mode<synchronous>, transform_indices = @transform_3, window_bounds = array<i64: 128, 128>}, {pipeline_mode = #tpu.pipeline_mode<synchronous>, transform_indices = @transform_4, window_bounds = array<i64: 1, 128>}, {pipeline_mode = #tpu.pipeline_mode<synchronous>, transform_indices = @transform_5, window_bounds = array<i64: 128, 128>}, {pipeline_mode = #tpu.pipeline_mode<synchronous>, transform_indices = @transform_6, window_bounds = array<i64: 1, 128>}, {transform_indices = @transform_7, window_bounds = array<i64: 2, 128>}]} {
    %c0 = arith.constant 0 : index
    %c0_0 = arith.constant 0 : index
    %0 = vector.load %arg1[%c0, %c0_0] : memref<2x32xf32, #tpu.memory_space<vmem>>, vector<2x32xf32>
    %1 = arith.truncf %0 : vector<2x32xf32> to vector<2x32xbf16>
    %c0_1 = arith.constant 0 : index
    %c0_2 = arith.constant 0 : index
    %2 = vector.load %arg2[%c0_1, %c0_2] : memref<32x128xbf16, #tpu.memory_space<vmem>>, vector<32x128xbf16>
    %cst = arith.constant dense<0.000000e+00> : vector<2x128xf32>
    %3 = tpu.matmul %1, %2, %cst {dimension_numbers = #tpu.dot_dimension_numbers<[1], [0], [0], [1], [0, 0, 1, 1], [], []>} : vector<2x32xbf16>, vector<32x128xbf16>, vector<2x128xf32> -> vector<2x128xf32>
    %c0_3 = arith.constant 0 : index
    %c0_4 = arith.constant 0 : index
    %4 = vector.load %arg3[%c0_3, %c0_4] : memref<1x128xf32, #tpu.memory_space<vmem>>, vector<1x128xf32>
    %5 = vector.broadcast %4 : vector<1x128xf32> to vector<2x128xf32>
    %6 = arith.addf %3, %5 : vector<2x128xf32>
    %cst_5 = arith.constant 0.000000e+00 : f32
    %7 = vector.broadcast %cst_5 : f32 to vector<2x128xf32>
    %8 = arith.cmpf ogt, %6, %7 : vector<2x128xf32>
    %cst_6 = arith.constant 1.000000e-01 : f32
    %9 = vector.broadcast %cst_6 : f32 to vector<2x128xf32>
    %10 = arith.mulf %9, %6 : vector<2x128xf32>
    %11 = arith.select %8, %6, %10 : vector<2x128xi1>, vector<2x128xf32>
    %12 = arith.truncf %11 : vector<2x128xf32> to vector<2x128xbf16>
    %c0_7 = arith.constant 0 : index
    %c0_8 = arith.constant 0 : index
    %13 = vector.load %arg4[%c0_7, %c0_8] : memref<128x128xbf16, #tpu.memory_space<vmem>>, vector<128x128xbf16>
    %cst_9 = arith.constant dense<0.000000e+00> : vector<2x128xf32>
    %14 = tpu.matmul %12, %13, %cst_9 {dimension_numbers = #tpu.dot_dimension_numbers<[1], [0], [0], [1], [0, 0, 1, 1], [], []>} : vector<2x128xbf16>, vector<128x128xbf16>, vector<2x128xf32> -> vector<2x128xf32>
    %c0_10 = arith.constant 0 : index
    %c0_11 = arith.constant 0 : index
    %15 = vector.load %arg5[%c0_10, %c0_11] : memref<1x128xf32, #tpu.memory_space<vmem>>, vector<1x128xf32>
    %16 = vector.broadcast %15 : vector<1x128xf32> to vector<2x128xf32>
    %17 = arith.addf %14, %16 : vector<2x128xf32>
    %cst_12 = arith.constant 0.000000e+00 : f32
    %18 = vector.broadcast %cst_12 : f32 to vector<2x128xf32>
    %19 = arith.cmpf ogt, %17, %18 : vector<2x128xf32>
    %cst_13 = arith.constant 1.000000e-01 : f32
    %20 = vector.broadcast %cst_13 : f32 to vector<2x128xf32>
    %21 = arith.mulf %20, %17 : vector<2x128xf32>
    %22 = arith.select %19, %17, %21 : vector<2x128xi1>, vector<2x128xf32>
    %23 = arith.truncf %22 : vector<2x128xf32> to vector<2x128xbf16>
    %c0_14 = arith.constant 0 : index
    %c0_15 = arith.constant 0 : index
    %24 = vector.load %arg6[%c0_14, %c0_15] : memref<128x128xbf16, #tpu.memory_space<vmem>>, vector<128x128xbf16>
    %cst_16 = arith.constant dense<0.000000e+00> : vector<2x128xf32>
    %25 = tpu.matmul %23, %24, %cst_16 {dimension_numbers = #tpu.dot_dimension_numbers<[1], [0], [0], [1], [0, 0, 1, 1], [], []>} : vector<2x128xbf16>, vector<128x128xbf16>, vector<2x128xf32> -> vector<2x128xf32>
    %c0_17 = arith.constant 0 : index
    %c0_18 = arith.constant 0 : index
    %26 = vector.load %arg7[%c0_17, %c0_18] : memref<1x128xf32, #tpu.memory_space<vmem>>, vector<1x128xf32>
    %27 = vector.broadcast %26 : vector<1x128xf32> to vector<2x128xf32>
    %28 = arith.addf %25, %27 : vector<2x128xf32>
    %c0_19 = arith.constant 0 : index
    %c0_20 = arith.constant 0 : index
    %29 = vector.load %arg8[%c0_19, %c0_20] : memref<2x128xf32, #tpu.memory_space<vmem>>, vector<2x128xf32>
    tpu.vector_store %arg8[%c0_19, %c0_20], %28 {strides = array<i32>} : memref<2x128xf32, #tpu.memory_space<vmem>>, vector<2x128xf32>,
    return
  }
  func.func @transform_0(%arg0: i32) -> (i32, i32) {
    %c0_i32 = arith.constant 0 : i32
    %c0_i32_0 = arith.constant 0 : i32
    return %arg0, %c0_i32 : i32, i32
  }
  func.func @transform_1(%arg0: i32) -> (i32, i32) {
    %c0_i32 = arith.constant 0 : i32
    %c0_i32_0 = arith.constant 0 : i32
    %c0_i32_1 = arith.constant 0 : i32
    return %c0_i32, %c0_i32_0 : i32, i32
  }
  func.func @transform_2(%arg0: i32) -> (i32, i32) {
    %c0_i32 = arith.constant 0 : i32
    %c0_i32_0 = arith.constant 0 : i32
    %c0_i32_1 = arith.constant 0 : i32
    return %c0_i32, %c0_i32_0 : i32, i32
  }
  func.func @transform_3(%arg0: i32) -> (i32, i32) {
    %c0_i32 = arith.constant 0 : i32
    %c0_i32_0 = arith.constant 0 : i32
    %c0_i32_1 = arith.constant 0 : i32
    return %c0_i32, %c0_i32_0 : i32, i32
  }
  func.func @transform_4(%arg0: i32) -> (i32, i32) {
    %c0_i32 = arith.constant 0 : i32
    %c0_i32_0 = arith.constant 0 : i32
    %c0_i32_1 = arith.constant 0 : i32
    return %c0_i32, %c0_i32_0 : i32, i32
  }
  func.func @transform_5(%arg0: i32) -> (i32, i32) {
    %c0_i32 = arith.constant 0 : i32
    %c0_i32_0 = arith.constant 0 : i32
    %c0_i32_1 = arith.constant 0 : i32
    return %c0_i32, %c0_i32_0 : i32, i32
  }
  func.func @transform_6(%arg0: i32) -> (i32, i32) {
    %c0_i32 = arith.constant 0 : i32
    %c0_i32_0 = arith.constant 0 : i32
    %c0_i32_1 = arith.constant 0 : i32
    return %c0_i32, %c0_i32_0 : i32, i32
  }
  func.func @transform_7(%arg0: i32) -> (i32, i32) {
    %c0_i32 = arith.constant 0 : i32
    %c0_i32_0 = arith.constant 0 : i32
    return %arg0, %c0_i32 : i32, i32
  }
}

</mosaic_0001>

<llo_original>
// kernel: tpu_custom_call.1
$region0: #{tpu_custom_call.1}
  #allocation0 [shape = 'u32[]', space=smem, size = 0x4, offset = 0x4, fixed_abs, tag = 'smem constant byte address 0x4 - core index']
  #allocation1 [shape = 'u32[72,128]{1,0:T(1,128)}', space=vmem, size = 0x9000, scoped, tag = 'internal scratch']
  %s0 = inlined_call_operand.hbm [shape: f32[2,32], index: 0, kind: input, shape index: {}]
  %s1 = inlined_call_operand.hbm [shape: bf16[32,128], index: 1, kind: input, shape index: {}]
  %s2 = inlined_call_operand.vmem [shape: f32[1,128], index: 2, kind: input, shape index: {}]
  %s3 = inlined_call_operand.hbm [shape: bf16[128,128], index: 3, kind: input, shape index: {}]
  %s4 = inlined_call_operand.vmem [shape: f32[1,128], index: 4, kind: input, shape index: {}]
  %s5 = inlined_call_operand.hbm [shape: bf16[128,128], index: 5, kind: input, shape index: {}]
  %s6 = inlined_call_operand.vmem [shape: f32[1,128], index: 6, kind: input, shape index: {}]
  %s7 = inlined_call_operand.hbm [shape: f32[2,128], index: 7, kind: output, shape index: {}]
  %s8 = sld [smem:[#allocation0]]
  $region54: #{tpu_custom_call.1} parent=0
    _
  %s10 = ssub.s32 1, %s8
  %s11 = scalar_select 0, %s10, %s8
  $region1: #{tpu_custom_call.1} parent=0
    #allocation2 [shape = 'u8[1024]{0}', space=vmem, size = 0x400, scoped, tag = 'input window, operand 0, single buffered']
    #allocation3 [shape = 's32[1]{0}', space=sflag, size = 0x4, scoped, tag = 'scoped memory for tpu_custom_call.1']
    #allocation4 [shape = 's32[1]{0}', space=sflag, size = 0x4, scoped, tag = 'scoped memory for tpu_custom_call.1']
    #allocation5 [shape = 'u8[8192]{0}', space=vmem, size = 0x2000, scoped, tag = 'input window, operand 1, single buffered']
    #allocation6 [shape = 's32[1]{0}', space=sflag, size = 0x4, scoped, tag = 'scoped memory for tpu_custom_call.1']
    #allocation7 [shape = 'u8[32768]{0}', space=vmem, size = 0x8000, scoped, tag = 'input window, operand 3, single buffered']
    #allocation8 [shape = 'u8[32768]{0}', space=vmem, size = 0x8000, scoped, tag = 'input window, operand 5, single buffered']
    #allocation9 [shape = 's32[1]{0}', space=sflag, size = 0x4, scoped, tag = 'scoped memory for tpu_custom_call.1']
    #allocation10 [shape = 'u8[1024]{0}', space=vmem, size = 0x400, scoped, tag = 'output window, operand 0, single buffered']
    %12 = vsyncpa [#allocation3], 0
    %13 = vsyncpa [#allocation6], 0
    %14 = vsyncpa [#allocation9], 0
    %15 = vsyncpa [#allocation4], 0
    // Predicated region
    $region2: #{tpu_custom_call.1} parent=1 // pred_check
      _
    $region3: #{tpu_custom_call.1} parent=1 // pred_check_branch
      %17 = sbr.rel (0) target = $region5
    $region4: #{tpu_custom_call.1} parent=1 // pred_region
      %19 = vsyncadd [#allocation3], 0
      %s21 = sshll.u32 %s0, 4
      %s22 = int_to_ptr.hbm [resolvable:$true] %s21
      %s23 = sshll.u32 [#allocation2], 4
      %s24 = int_to_ptr.vmem [resolvable:$true] %s23
      %26 = dma.hbm_to_vmem [thread:$0]  %s22, 32, %s24, [#allocation3]
    $region5: #{tpu_custom_call.1} parent=1 // pred_fallthru
      _
    // Predicated region
    $region6: #{tpu_custom_call.1} parent=1 // pred_check
      _
    $region7: #{tpu_custom_call.1} parent=1 // pred_check_branch
      %28 = sbr.rel (0) target = $region9
    $region8: #{tpu_custom_call.1} parent=1 // pred_region
      %30 = vsyncadd [#allocation6], 0
      %s31 = sshll.u32 %s1, 4
      %s32 = int_to_ptr.hbm [resolvable:$true] %s31
      %s33 = sshll.u32 [#allocation5], 4
      %s34 = int_to_ptr.vmem [resolvable:$true] %s33
      %39 = dma.hbm_to_vmem [thread:$0]  %s32, 256, %s34, [#allocation6], 64, 64, 4
    $region9: #{tpu_custom_call.1} parent=1 // pred_fallthru
      _
    // Predicated region
    $region10: #{tpu_custom_call.1} parent=1 // pred_check
      _
    $region11: #{tpu_custom_call.1} parent=1 // pred_check_branch
      %41 = sbr.rel (0) target = $region13
    $region12: #{tpu_custom_call.1} parent=1 // pred_region
      _
    $region13: #{tpu_custom_call.1} parent=1 // pred_fallthru
      _
    // Predicated region
    $region14: #{tpu_custom_call.1} parent=1 // pred_check
      _
    $region15: #{tpu_custom_call.1} parent=1 // pred_check_branch
      %43 = sbr.rel (0) target = $region17
    $region16: #{tpu_custom_call.1} parent=1 // pred_region
      %45 = vsyncadd [#allocation6], 0
      %s46 = sshll.u32 %s3, 4
      %s47 = int_to_ptr.hbm [resolvable:$true] %s46
      %s48 = sshll.u32 [#allocation7], 4
      %s49 = int_to_ptr.vmem [resolvable:$true] %s48
      %54 = dma.hbm_to_vmem [thread:$0]  %s47, 1024, %s49, [#allocation6], 64, 64, 4
    $region17: #{tpu_custom_call.1} parent=1 // pred_fallthru
      _
    // Predicated region
    $region18: #{tpu_custom_call.1} parent=1 // pred_check
      _
    $region19: #{tpu_custom_call.1} parent=1 // pred_check_branch
      %56 = sbr.rel (0) target = $region21
    $region20: #{tpu_custom_call.1} parent=1 // pred_region
      _
    $region21: #{tpu_custom_call.1} parent=1 // pred_fallthru
      _
    // Predicated region
    $region22: #{tpu_custom_call.1} parent=1 // pred_check
      _
    $region23: #{tpu_custom_call.1} parent=1 // pred_check_branch
      %58 = sbr.rel (0) target = $region25
    $region24: #{tpu_custom_call.1} parent=1 // pred_region
      %60 = vsyncadd [#allocation9], 0
      %s61 = sshll.u32 %s5, 4
      %s62 = int_to_ptr.hbm [resolvable:$true] %s61
      %s63 = sshll.u32 [#allocation8], 4
      %s64 = int_to_ptr.vmem [resolvable:$true] %s63
      %69 = dma.hbm_to_vmem [thread:$0]  %s62, 1024, %s64, [#allocation9], 64, 64, 4
    $region25: #{tpu_custom_call.1} parent=1 // pred_fallthru
      _
    // Predicated region
    $region26: #{tpu_custom_call.1} parent=1 // pred_check
      _
    $region27: #{tpu_custom_call.1} parent=1 // pred_check_branch
      %71 = sbr.rel (0) target = $region29
    $region28: #{tpu_custom_call.1} parent=1 // pred_region
      _
    $region29: #{tpu_custom_call.1} parent=1 // pred_fallthru
      _
    // Predicated region
    $region30: #{tpu_custom_call.1} parent=1 // pred_check
      _
    $region31: #{tpu_custom_call.1} parent=1 // pred_check_branch
      %73 = sbr.rel (0) target = $region33
    $region32: #{tpu_custom_call.1} parent=1 // pred_region
      %75 = dma.done [#allocation3], 32
    $region33: #{tpu_custom_call.1} parent=1 // pred_fallthru
      _
    // Predicated region
    $region34: #{tpu_custom_call.1} parent=1 // pred_check
      _
    $region35: #{tpu_custom_call.1} parent=1 // pred_check_branch
      %77 = sbr.rel (0) target = $region37
    $region36: #{tpu_custom_call.1} parent=1 // pred_region
      %79 = dma.done [#allocation6], 256
    $region37: #{tpu_custom_call.1} parent=1 // pred_fallthru
      _
    // Predicated region
    $region38: #{tpu_custom_call.1} parent=1 // pred_check
      _
    $region39: #{tpu_custom_call.1} parent=1 // pred_check_branch
      %81 = sbr.rel (0) target = $region41
    $region40: #{tpu_custom_call.1} parent=1 // pred_region
      %83 = dma.done [#allocation6], 1024
    $region41: #{tpu_custom_call.1} parent=1 // pred_fallthru
      _
    // Predicated region
    $region42: #{tpu_custom_call.1} parent=1 // pred_check
      _
    $region43: #{tpu_custom_call.1} parent=1 // pred_check_branch
      %85 = sbr.rel (0) target = $region45
    $region44: #{tpu_custom_call.1} parent=1 // pred_region
      %87 = dma.done [#allocation9], 1024
    $region45: #{tpu_custom_call.1} parent=1 // pred_fallthru
      _
    %v89 = vld [vmem:[#allocation2] sm:$0x3]
    %v90 = vpack.c.bf16 %v89, %v89
    %v91 = vld [vmem:[#allocation5] sm:$0xf]
    %v92 = vld [vmem:[#allocation5 + $0x4] sm:$0xf]
    %v93 = vld [vmem:[#allocation5 + $0x8] sm:$0xf]
    %v94 = vld [vmem:[#allocation5 + $0xc] sm:$0xf]
    %v95 = vld [vmem:[%s2] sm:$0x1]
    %v97 = vperm.slane %v95, 0
    %v103 = vunpack.c.l.b16 %v91
    %v104 = vunpack.c.l.b16 %v92
    %v105 = vunpack.c.l.b16 %v93
    %v106 = vunpack.c.l.b16 %v94
    %v107 = vpack.c.b16 %v104, %v103
    %v108 = vpack.c.b16 %v106, %v105
    %vm111 = vcmask 261120
    %v113 = vsel %vm111, %v90, 0
    %115 = vmatpush.bf16.msra.mxu0 0
    %116 = vmatpush.bf16.msra.mxu0 0
    %117 = vmatpush.bf16.msra.mxu0 0
    %118 = vmatpush.bf16.msra.mxu0 0
    %119 = vmatpush.bf16.msra.mxu0 0
    %120 = vmatpush.bf16.msra.mxu0 0
    %121 = vmatpush.bf16.msra.mxu0 %v108
    %122 = vmatpush.bf16.msra.mxu0 %v107
    %123 = vmatmul.bf16.gmra.mxu0 %v113
    %v124 = vpop.f32.mrf.mxu0
    %v125 = vadd.f32 %v97, %v124
    %v126 = vpop.f32.mrf.mxu0
    %127 = vdwg.mxu0
    %vm128 = vcmp.gt.f32.partialorder %v125, 0.0
    %v129 = vmul.f32 %v125, 0.1
    %v130 = vsel %vm128, %v125, %v129
    %v131 = vpack.c.bf16 %v130, %v130
    %v132 = vld [vmem:[#allocation7] sm:$0xf]
    %v133 = vld [vmem:[#allocation7 + $0x4] sm:$0xf]
    %v134 = vld [vmem:[#allocation7 + $0x8] sm:$0xf]
    %v135 = vld [vmem:[#allocation7 + $0xc] sm:$0xf]
    %v136 = vld [vmem:[#allocation7 + $0x10] sm:$0xf]
    %v137 = vld [vmem:[#allocation7 + $0x14] sm:$0xf]
    %v138 = vld [vmem:[#allocation7 + $0x18] sm:$0xf]
    %v139 = vld [vmem:[#allocation7 + $0x1c] sm:$0xf]
    %v140 = vld [vmem:[#allocation7 + $0x20] sm:$0xf]
    %v141 = vld [vmem:[#allocation7 + $0x24] sm:$0xf]
    %v142 = vld [vmem:[#allocation7 + $0x28] sm:$0xf]
    %v143 = vld [vmem:[#allocation7 + $0x2c] sm:$0xf]
    %v144 = vld [vmem:[#allocation7 + $0x30] sm:$0xf]
    %v145 = vld [vmem:[#allocation7 + $0x34] sm:$0xf]
    %v146 = vld [vmem:[#allocation7 + $0x38] sm:$0xf]
    %v147 = vld [vmem:[#allocation7 + $0x3c] sm:$0xf]
    %v148 = vld [vmem:[%s4] sm:$0x1]
    %v150 = vperm.slane %v148, 0
    %v168 = vunpack.c.l.b16 %v132
    %v169 = vunpack.c.l.b16 %v133
    %v170 = vunpack.c.l.b16 %v134
    %v171 = vunpack.c.l.b16 %v135
    %v172 = vunpack.c.l.b16 %v136
    %v173 = vunpack.c.l.b16 %v137
    %v174 = vunpack.c.l.b16 %v138
    %v175 = vunpack.c.l.b16 %v139
    %v176 = vunpack.c.l.b16 %v140
    %v177 = vunpack.c.l.b16 %v141
    %v178 = vunpack.c.l.b16 %v142
    %v179 = vunpack.c.l.b16 %v143
    %v180 = vunpack.c.l.b16 %v144
    %v181 = vunpack.c.l.b16 %v145
    %v182 = vunpack.c.l.b16 %v146
    %v183 = vunpack.c.l.b16 %v147
    %v184 = vpack.c.b16 %v169, %v168
    %v185 = vpack.c.b16 %v171, %v170
    %v186 = vpack.c.b16 %v173, %v172
    %v187 = vpack.c.b16 %v175, %v174
    %v188 = vpack.c.b16 %v177, %v176
    %v189 = vpack.c.b16 %v179, %v178
    %v190 = vpack.c.b16 %v181, %v180
    %v191 = vpack.c.b16 %v183, %v182
    %200 = vmatpush.bf16.msra.mxu0 %v191
    %201 = vmatpush.bf16.msra.mxu0 %v190
    %202 = vmatpush.bf16.msra.mxu0 %v189
    %203 = vmatpush.bf16.msra.mxu0 %v188
    %204 = vmatpush.bf16.msra.mxu0 %v187
    %205 = vmatpush.bf16.msra.mxu0 %v186
    %206 = vmatpush.bf16.msra.mxu0 %v185
    %207 = vmatpush.bf16.msra.mxu0 %v184
    %208 = vmatmul.bf16.gmra.mxu0 %v131
    %v209 = vpop.f32.mrf.mxu0
    %v210 = vadd.f32 %v150, %v209
    %v211 = vpop.f32.mrf.mxu0
    %212 = vdwg.mxu0
    %vm213 = vcmp.gt.f32.partialorder %v210, 0.0
    %v214 = vmul.f32 %v210, 0.1
    %v215 = vsel %vm213, %v210, %v214
    %v216 = vpack.c.bf16 %v215, %v215
    %v217 = vld [vmem:[#allocation8] sm:$0xf]
    %v218 = vld [vmem:[#allocation8 + $0x4] sm:$0xf]
    %v219 = vld [vmem:[#allocation8 + $0x8] sm:$0xf]
    %v220 = vld [vmem:[#allocation8 + $0xc] sm:$0xf]
    %v221 = vld [vmem:[#allocation8 + $0x10] sm:$0xf]
    %v222 = vld [vmem:[#allocation8 + $0x14] sm:$0xf]
    %v223 = vld [vmem:[#allocation8 + $0x18] sm:$0xf]
    %v224 = vld [vmem:[#allocation8 + $0x1c] sm:$0xf]
    %v225 = vld [vmem:[#allocation8 + $0x20] sm:$0xf]
    %v226 = vld [vmem:[#allocation8 + $0x24] sm:$0xf]
    %v227 = vld [vmem:[#allocation8 + $0x28] sm:$0xf]
    %v228 = vld [vmem:[#allocation8 + $0x2c] sm:$0xf]
    %v229 = vld [vmem:[#allocation8 + $0x30] sm:$0xf]
    %v230 = vld [vmem:[#allocation8 + $0x34] sm:$0xf]
    %v231 = vld [vmem:[#allocation8 + $0x38] sm:$0xf]
    %v232 = vld [vmem:[#allocation8 + $0x3c] sm:$0xf]
    %v233 = vld [vmem:[%s6] sm:$0x1]
    %v235 = vperm.slane %v233, 0
    %v253 = vunpack.c.l.b16 %v217
    %v254 = vunpack.c.l.b16 %v218
    %v255 = vunpack.c.l.b16 %v219
    %v256 = vunpack.c.l.b16 %v220
    %v257 = vunpack.c.l.b16 %v221
    %v258 = vunpack.c.l.b16 %v222
    %v259 = vunpack.c.l.b16 %v223
    %v260 = vunpack.c.l.b16 %v224
    %v261 = vunpack.c.l.b16 %v225
    %v262 = vunpack.c.l.b16 %v226
    %v263 = vunpack.c.l.b16 %v227
    %v264 = vunpack.c.l.b16 %v228
    %v265 = vunpack.c.l.b16 %v229
    %v266 = vunpack.c.l.b16 %v230
    %v267 = vunpack.c.l.b16 %v231
    %v268 = vunpack.c.l.b16 %v232
    %v269 = vpack.c.b16 %v254, %v253
    %v270 = vpack.c.b16 %v256, %v255
    %v271 = vpack.c.b16 %v258, %v257
    %v272 = vpack.c.b16 %v260, %v259
    %v273 = vpack.c.b16 %v262, %v261
    %v274 = vpack.c.b16 %v264, %v263
    %v275 = vpack.c.b16 %v266, %v265
    %v276 = vpack.c.b16 %v268, %v267
    %285 = vmatpush.bf16.msra.mxu0 %v276
    %286 = vmatpush.bf16.msra.mxu0 %v275
    %287 = vmatpush.bf16.msra.mxu0 %v274
    %288 = vmatpush.bf16.msra.mxu0 %v273
    %289 = vmatpush.bf16.msra.mxu0 %v272
    %290 = vmatpush.bf16.msra.mxu0 %v271
    %291 = vmatpush.bf16.msra.mxu0 %v270
    %292 = vmatpush.bf16.msra.mxu0 %v269
    %293 = vmatmul.bf16.gmra.mxu0 %v216
    %v294 = vpop.f32.mrf.mxu0
    %v295 = vadd.f32 %v235, %v294
    %v296 = vpop.f32.mrf.mxu0
    %297 = vdwg.mxu0
    %298 = vst [vmem:[#allocation10] sm:$0x3] %v295
    // Predicated region
    $region46: #{tpu_custom_call.1} parent=1 // pred_check
      _
    $region47: #{tpu_custom_call.1} parent=1 // pred_check_branch
      %300 = sbr.rel (0) target = $region49
    $region48: #{tpu_custom_call.1} parent=1 // pred_region
      %302 = vsyncadd [#allocation4], 0
      %s304 = sshll.u32 [#allocation10], 4
      %s305 = int_to_ptr.vmem [resolvable:$true] %s304
      %s306 = sshll.u32 %s7, 4
      %s307 = int_to_ptr.hbm [resolvable:$true] %s306
      %309 = dma.vmem_to_hbm [thread:$0]  %s305, 32, %s307, [#allocation4]
    $region49: #{tpu_custom_call.1} parent=1 // pred_fallthru
      _
    // Predicated region
    $region50: #{tpu_custom_call.1} parent=1 // pred_check
      _
    $region51: #{tpu_custom_call.1} parent=1 // pred_check_branch
      %311 = sbr.rel (0) target = $region53
    $region52: #{tpu_custom_call.1} parent=1 // pred_region
      %313 = dma.done [#allocation4], 32
    $region53: #{tpu_custom_call.1} parent=1 // pred_fallthru
      _
    %314 = vsyncpa [#allocation3], 1
    %315 = vsyncpa [#allocation6], 1
    %316 = vsyncpa [#allocation9], 1
    %317 = vsyncpa [#allocation4], 1

// kernel: tpu_custom_call.1
$region0: #{tpu_custom_call.1}
  #allocation0 [shape = 'u32[]', space=smem, size = 0x4, offset = 0x4, fixed_abs, tag = 'smem constant byte address 0x4 - core index']
  #allocation1 [shape = 'u32[72,128]{1,0:T(1,128)}', space=vmem, size = 0x9000, scoped, tag = 'internal scratch']
  %s0 = inlined_call_operand.hbm [shape: f32[2,32], index: 0, kind: input, shape index: {}]
  %s1 = inlined_call_operand.hbm [shape: bf16[32,128], index: 1, kind: input, shape index: {}]
  %s2 = inlined_call_operand.vmem [shape: f32[1,128], index: 2, kind: input, shape index: {}]
  %s3 = inlined_call_operand.hbm [shape: bf16[128,128], index: 3, kind: input, shape index: {}]
  %s4 = inlined_call_operand.vmem [shape: f32[1,128], index: 4, kind: input, shape index: {}]
  %s5 = inlined_call_operand.hbm [shape: bf16[128,128], index: 5, kind: input, shape index: {}]
  %s6 = inlined_call_operand.vmem [shape: f32[1,128], index: 6, kind: input, shape index: {}]
  %s7 = inlined_call_operand.hbm [shape: f32[2,128], index: 7, kind: output, shape index: {}]
  %s8 = sld [smem:[#allocation0]]
  $region54: #{tpu_custom_call.1} parent=0
    _
  %s10 = ssub.s32 1, %s8
  %s11 = scalar_select 0, %s10, %s8
  $region1: #{tpu_custom_call.1} parent=0
    #allocation2 [shape = 'u8[1024]{0}', space=vmem, size = 0x400, scoped, tag = 'input window, operand 0, single buffered']
    #allocation3 [shape = 's32[1]{0}', space=sflag, size = 0x4, scoped, tag = 'scoped memory for tpu_custom_call.1']
    #allocation4 [shape = 's32[1]{0}', space=sflag, size = 0x4, scoped, tag = 'scoped memory for tpu_custom_call.1']
    #allocation5 [shape = 'u8[8192]{0}', space=vmem, size = 0x2000, scoped, tag = 'input window, operand 1, single buffered']
    #allocation6 [shape = 's32[1]{0}', space=sflag, size = 0x4, scoped, tag = 'scoped memory for tpu_custom_call.1']
    #allocation7 [shape = 'u8[32768]{0}', space=vmem, size = 0x8000, scoped, tag = 'input window, operand 3, single buffered']
    #allocation8 [shape = 'u8[32768]{0}', space=vmem, size = 0x8000, scoped, tag = 'input window, operand 5, single buffered']
    #allocation9 [shape = 's32[1]{0}', space=sflag, size = 0x4, scoped, tag = 'scoped memory for tpu_custom_call.1']
    #allocation10 [shape = 'u8[1024]{0}', space=vmem, size = 0x400, scoped, tag = 'output window, operand 0, single buffered']
    %12 = vsyncpa [#allocation3], 0
    %13 = vsyncpa [#allocation6], 0
    %14 = vsyncpa [#allocation9], 0
    %15 = vsyncpa [#allocation4], 0
    // Predicated region
    $region2: #{tpu_custom_call.1} parent=1 // pred_check
      _
    $region3: #{tpu_custom_call.1} parent=1 // pred_check_branch
      %17 = sbr.rel (0) target = $region5
    $region4: #{tpu_custom_call.1} parent=1 // pred_region
      %19 = vsyncadd [#allocation3], 0
      %s21 = sshll.u32 %s0, 4
      %s22 = int_to_ptr.hbm [resolvable:$true] %s21
      %s23 = sshll.u32 [#allocation2], 4
      %s24 = int_to_ptr.vmem [resolvable:$true] %s23
      %26 = dma.hbm_to_vmem [thread:$0]  %s22, 32, %s24, [#allocation3]
    $region5: #{tpu_custom_call.1} parent=1 // pred_fallthru
      _
    // Predicated region
    $region6: #{tpu_custom_call.1} parent=1 // pred_check
      _
    $region7: #{tpu_custom_call.1} parent=1 // pred_check_branch
      %28 = sbr.rel (0) target = $region9
    $region8: #{tpu_custom_call.1} parent=1 // pred_region
      %30 = vsyncadd [#allocation6], 0
      %s31 = sshll.u32 %s1, 4
      %s32 = int_to_ptr.hbm [resolvable:$true] %s31
      %s33 = sshll.u32 [#allocation5], 4
      %s34 = int_to_ptr.vmem [resolvable:$true] %s33
      %39 = dma.hbm_to_vmem [thread:$0]  %s32, 256, %s34, [#allocation6], 64, 64, 4
    $region9: #{tpu_custom_call.1} parent=1 // pred_fallthru
      _
    // Predicated region
    $region10: #{tpu_custom_call.1} parent=1 // pred_check
      _
    $region11: #{tpu_custom_call.1} parent=1 // pred_check_branch
      %41 = sbr.rel (0) target = $region13
    $region12: #{tpu_custom_call.1} parent=1 // pred_region
      _
    $region13: #{tpu_custom_call.1} parent=1 // pred_fallthru
      _
    // Predicated region
    $region14: #{tpu_custom_call.1} parent=1 // pred_check
      _
    $region15: #{tpu_custom_call.1} parent=1 // pred_check_branch
      %43 = sbr.rel (0) target = $region17
    $region16: #{tpu_custom_call.1} parent=1 // pred_region
      %45 = vsyncadd [#allocation6], 0
      %s46 = sshll.u32 %s3, 4
      %s47 = int_to_ptr.hbm [resolvable:$true] %s46
      %s48 = sshll.u32 [#allocation7], 4
      %s49 = int_to_ptr.vmem [resolvable:$true] %s48
      %54 = dma.hbm_to_vmem [thread:$0]  %s47, 1024, %s49, [#allocation6], 64, 64, 4
    $region17: #{tpu_custom_call.1} parent=1 // pred_fallthru
      _
    // Predicated region
    $region18: #{tpu_custom_call.1} parent=1 // pred_check
      _
    $region19: #{tpu_custom_call.1} parent=1 // pred_check_branch
      %56 = sbr.rel (0) target = $region21
    $region20: #{tpu_custom_call.1} parent=1 // pred_region
      _
    $region21: #{tpu_custom_call.1} parent=1 // pred_fallthru
      _
    // Predicated region
    $region22: #{tpu_custom_call.1} parent=1 // pred_check
      _
    $region23: #{tpu_custom_call.1} parent=1 // pred_check_branch
      %58 = sbr.rel (0) target = $region25
    $region24: #{tpu_custom_call.1} parent=1 // pred_region
      %60 = vsyncadd [#allocation9], 0
      %s61 = sshll.u32 %s5, 4
      %s62 = int_to_ptr.hbm [resolvable:$true] %s61
      %s63 = sshll.u32 [#allocation8], 4
      %s64 = int_to_ptr.vmem [resolvable:$true] %s63
      %69 = dma.hbm_to_vmem [thread:$0]  %s62, 1024, %s64, [#allocation9], 64, 64, 4
    $region25: #{tpu_custom_call.1} parent=1 // pred_fallthru
      _
    // Predicated region
    $region26: #{tpu_custom_call.1} parent=1 // pred_check
      _
    $region27: #{tpu_custom_call.1} parent=1 // pred_check_branch
      %71 = sbr.rel (0) target = $region29
    $region28: #{tpu_custom_call.1} parent=1 // pred_region
      _
    $region29: #{tpu_custom_call.1} parent=1 // pred_fallthru
      _
    // Predicated region
    $region30: #{tpu_custom_call.1} parent=1 // pred_check
      _
    $region31: #{tpu_custom_call.1} parent=1 // pred_check_branch
      %73 = sbr.rel (0) target = $region33
    $region32: #{tpu_custom_call.1} parent=1 // pred_region
      %75 = dma.done [#allocation3], 32
    $region33: #{tpu_custom_call.1} parent=1 // pred_fallthru
      _
    // Predicated region
    $region34: #{tpu_custom_call.1} parent=1 // pred_check
      _
    $region35: #{tpu_custom_call.1} parent=1 // pred_check_branch
      %77 = sbr.rel (0) target = $region37
    $region36: #{tpu_custom_call.1} parent=1 // pred_region
      %79 = dma.done [#allocation6], 256
    $region37: #{tpu_custom_call.1} parent=1 // pred_fallthru
      _
    // Predicated region
    $region38: #{tpu_custom_call.1} parent=1 // pred_check
      _
    $region39: #{tpu_custom_call.1} parent=1 // pred_check_branch
      %81 = sbr.rel (0) target = $region41
    $region40: #{tpu_custom_call.1} parent=1 // pred_region
      %83 = dma.done [#allocation6], 1024
    $region41: #{tpu_custom_call.1} parent=1 // pred_fallthru
      _
    // Predicated region
    $region42: #{tpu_custom_call.1} parent=1 // pred_check
      _
    $region43: #{tpu_custom_call.1} parent=1 // pred_check_branch
      %85 = sbr.rel (0) target = $region45
    $region44: #{tpu_custom_call.1} parent=1 // pred_region
      %87 = dma.done [#allocation9], 1024
    $region45: #{tpu_custom_call.1} parent=1 // pred_fallthru
      _
    %v89 = vld [vmem:[#allocation2] sm:$0x3]
    %v90 = vpack.c.bf16 %v89, %v89
    %v91 = vld [vmem:[#allocation5] sm:$0xf]
    %v92 = vld [vmem:[#allocation5 + $0x4] sm:$0xf]
    %v93 = vld [vmem:[#allocation5 + $0x8] sm:$0xf]
    %v94 = vld [vmem:[#allocation5 + $0xc] sm:$0xf]
    %v95 = vld [vmem:[%s2] sm:$0x1]
    %v97 = vperm.slane %v95, 0
    %v103 = vunpack.c.l.b16 %v91
    %v104 = vunpack.c.l.b16 %v92
    %v105 = vunpack.c.l.b16 %v93
    %v106 = vunpack.c.l.b16 %v94
    %v107 = vpack.c.b16 %v104, %v103
    %v108 = vpack.c.b16 %v106, %v105
    %vm111 = vcmask 261120
    %v113 = vsel %vm111, %v90, 0
    %115 = vmatpush.bf16.msra.mxu0 0
    %116 = vmatpush.bf16.msra.mxu0 0
    %117 = vmatpush.bf16.msra.mxu0 0
    %118 = vmatpush.bf16.msra.mxu0 0
    %119 = vmatpush.bf16.msra.mxu0 0
    %120 = vmatpush.bf16.msra.mxu0 0
    %121 = vmatpush.bf16.msra.mxu0 %v108
    %122 = vmatpush.bf16.msra.mxu0 %v107
    %123 = vmatmul.bf16.gmra.mxu0 %v113
    %v124 = vpop.f32.mrf.mxu0
    %v125 = vadd.f32 %v97, %v124
    %v126 = vpop.f32.mrf.mxu0
    %127 = vdwg.mxu0
    %vm128 = vcmp.gt.f32.partialorder %v125, 0.0
    %v129 = vmul.f32 %v125, 0.1
    %v130 = vsel %vm128, %v125, %v129
    %v131 = vpack.c.bf16 %v130, %v130
    %v132 = vld [vmem:[#allocation7] sm:$0xf]
    %v133 = vld [vmem:[#allocation7 + $0x4] sm:$0xf]
    %v134 = vld [vmem:[#allocation7 + $0x8] sm:$0xf]
    %v135 = vld [vmem:[#allocation7 + $0xc] sm:$0xf]
    %v136 = vld [vmem:[#allocation7 + $0x10] sm:$0xf]
    %v137 = vld [vmem:[#allocation7 + $0x14] sm:$0xf]
    %v138 = vld [vmem:[#allocation7 + $0x18] sm:$0xf]
    %v139 = vld [vmem:[#allocation7 + $0x1c] sm:$0xf]
    %v140 = vld [vmem:[#allocation7 + $0x20] sm:$0xf]
    %v141 = vld [vmem:[#allocation7 + $0x24] sm:$0xf]
    %v142 = vld [vmem:[#allocation7 + $0x28] sm:$0xf]
    %v143 = vld [vmem:[#allocation7 + $0x2c] sm:$0xf]
    %v144 = vld [vmem:[#allocation7 + $0x30] sm:$0xf]
    %v145 = vld [vmem:[#allocation7 + $0x34] sm:$0xf]
    %v146 = vld [vmem:[#allocation7 + $0x38] sm:$0xf]
    %v147 = vld [vmem:[#allocation7 + $0x3c] sm:$0xf]
    %v148 = vld [vmem:[%s4] sm:$0x1]
    %v150 = vperm.slane %v148, 0
    %v168 = vunpack.c.l.b16 %v132
    %v169 = vunpack.c.l.b16 %v133
    %v170 = vunpack.c.l.b16 %v134
    %v171 = vunpack.c.l.b16 %v135
    %v172 = vunpack.c.l.b16 %v136
    %v173 = vunpack.c.l.b16 %v137
    %v174 = vunpack.c.l.b16 %v138
    %v175 = vunpack.c.l.b16 %v139
    %v176 = vunpack.c.l.b16 %v140
    %v177 = vunpack.c.l.b16 %v141
    %v178 = vunpack.c.l.b16 %v142
    %v179 = vunpack.c.l.b16 %v143
    %v180 = vunpack.c.l.b16 %v144
    %v181 = vunpack.c.l.b16 %v145
    %v182 = vunpack.c.l.b16 %v146
    %v183 = vunpack.c.l.b16 %v147
    %v184 = vpack.c.b16 %v169, %v168
    %v185 = vpack.c.b16 %v171, %v170
    %v186 = vpack.c.b16 %v173, %v172
    %v187 = vpack.c.b16 %v175, %v174
    %v188 = vpack.c.b16 %v177, %v176
    %v189 = vpack.c.b16 %v179, %v178
    %v190 = vpack.c.b16 %v181, %v180
    %v191 = vpack.c.b16 %v183, %v182
    %200 = vmatpush.bf16.msra.mxu0 %v191
    %201 = vmatpush.bf16.msra.mxu0 %v190
    %202 = vmatpush.bf16.msra.mxu0 %v189
    %203 = vmatpush.bf16.msra.mxu0 %v188
    %204 = vmatpush.bf16.msra.mxu0 %v187
    %205 = vmatpush.bf16.msra.mxu0 %v186
    %206 = vmatpush.bf16.msra.mxu0 %v185
    %207 = vmatpush.bf16.msra.mxu0 %v184
    %208 = vmatmul.bf16.gmra.mxu0 %v131
    %v209 = vpop.f32.mrf.mxu0
    %v210 = vadd.f32 %v150, %v209
    %v211 = vpop.f32.mrf.mxu0
    %212 = vdwg.mxu0
    %vm213 = vcmp.gt.f32.partialorder %v210, 0.0
    %v214 = vmul.f32 %v210, 0.1
    %v215 = vsel %vm213, %v210, %v214
    %v216 = vpack.c.bf16 %v215, %v215
    %v217 = vld [vmem:[#allocation8] sm:$0xf]
    %v218 = vld [vmem:[#allocation8 + $0x4] sm:$0xf]
    %v219 = vld [vmem:[#allocation8 + $0x8] sm:$0xf]
    %v220 = vld [vmem:[#allocation8 + $0xc] sm:$0xf]
    %v221 = vld [vmem:[#allocation8 + $0x10] sm:$0xf]
    %v222 = vld [vmem:[#allocation8 + $0x14] sm:$0xf]
    %v223 = vld [vmem:[#allocation8 + $0x18] sm:$0xf]
    %v224 = vld [vmem:[#allocation8 + $0x1c] sm:$0xf]
    %v225 = vld [vmem:[#allocation8 + $0x20] sm:$0xf]
    %v226 = vld [vmem:[#allocation8 + $0x24] sm:$0xf]
    %v227 = vld [vmem:[#allocation8 + $0x28] sm:$0xf]
    %v228 = vld [vmem:[#allocation8 + $0x2c] sm:$0xf]
    %v229 = vld [vmem:[#allocation8 + $0x30] sm:$0xf]
    %v230 = vld [vmem:[#allocation8 + $0x34] sm:$0xf]
    %v231 = vld [vmem:[#allocation8 + $0x38] sm:$0xf]
    %v232 = vld [vmem:[#allocation8 + $0x3c] sm:$0xf]
    %v233 = vld [vmem:[%s6] sm:$0x1]
    %v235 = vperm.slane %v233, 0
    %v253 = vunpack.c.l.b16 %v217
    %v254 = vunpack.c.l.b16 %v218
    %v255 = vunpack.c.l.b16 %v219
    %v256 = vunpack.c.l.b16 %v220
    %v257 = vunpack.c.l.b16 %v221
    %v258 = vunpack.c.l.b16 %v222
    %v259 = vunpack.c.l.b16 %v223
    %v260 = vunpack.c.l.b16 %v224
    %v261 = vunpack.c.l.b16 %v225
    %v262 = vunpack.c.l.b16 %v226
    %v263 = vunpack.c.l.b16 %v227
    %v264 = vunpack.c.l.b16 %v228
    %v265 = vunpack.c.l.b16 %v229
    %v266 = vunpack.c.l.b16 %v230
    %v267 = vunpack.c.l.b16 %v231
    %v268 = vunpack.c.l.b16 %v232
    %v269 = vpack.c.b16 %v254, %v253
    %v270 = vpack.c.b16 %v256, %v255
    %v271 = vpack.c.b16 %v258, %v257
    %v272 = vpack.c.b16 %v260, %v259
    %v273 = vpack.c.b16 %v262, %v261
    %v274 = vpack.c.b16 %v264, %v263
    %v275 = vpack.c.b16 %v266, %v265
    %v276 = vpack.c.b16 %v268, %v267
    %285 = vmatpush.bf16.msra.mxu0 %v276
    %286 = vmatpush.bf16.msra.mxu0 %v275
    %287 = vmatpush.bf16.msra.mxu0 %v274
    %288 = vmatpush.bf16.msra.mxu0 %v273
    %289 = vmatpush.bf16.msra.mxu0 %v272
    %290 = vmatpush.bf16.msra.mxu0 %v271
    %291 = vmatpush.bf16.msra.mxu0 %v270
    %292 = vmatpush.bf16.msra.mxu0 %v269
    %293 = vmatmul.bf16.gmra.mxu0 %v216
    %v294 = vpop.f32.mrf.mxu0
    %v295 = vadd.f32 %v235, %v294
    %v296 = vpop.f32.mrf.mxu0
    %297 = vdwg.mxu0
    %298 = vst [vmem:[#allocation10] sm:$0x3] %v295
    // Predicated region
    $region46: #{tpu_custom_call.1} parent=1 // pred_check
      _
    $region47: #{tpu_custom_call.1} parent=1 // pred_check_branch
      %300 = sbr.rel (0) target = $region49
    $region48: #{tpu_custom_call.1} parent=1 // pred_region
      %302 = vsyncadd [#allocation4], 0
      %s304 = sshll.u32 [#allocation10], 4
      %s305 = int_to_ptr.vmem [resolvable:$true] %s304
      %s306 = sshll.u32 %s7, 4
      %s307 = int_to_ptr.hbm [resolvable:$true] %s306
      %309 = dma.vmem_to_hbm [thread:$0]  %s305, 32, %s307, [#allocation4]
    $region49: #{tpu_custom_call.1} parent=1 // pred_fallthru
      _
    // Predicated region
    $region50: #{tpu_custom_call.1} parent=1 // pred_check
      _
    $region51: #{tpu_custom_call.1} parent=1 // pred_check_branch
      %311 = sbr.rel (0) target = $region53
    $region52: #{tpu_custom_call.1} parent=1 // pred_region
      %313 = dma.done [#allocation4], 32
    $region53: #{tpu_custom_call.1} parent=1 // pred_fallthru
      _
    %314 = vsyncpa [#allocation3], 1
    %315 = vsyncpa [#allocation6], 1
    %316 = vsyncpa [#allocation9], 1
    %317 = vsyncpa [#allocation4], 1

</llo_original>
